<compile_context>
chip_gen: v7x
topology: tpu7x:2x2x1
jax: 0.10.0
libtpu: 0.0.40
codegen_flags: <defaults>
</compile_context>

<pallas_src>
import jax
import jax.numpy as jnp
from jax.experimental import pallas as pl
from jax.experimental.pallas import tpu as pltpu


def gstf_kernel(b_eff_ref, x_ref, w_ref, s_ref, h_ref, acc_ref):
    # b_eff_ref: SMEM (1,) f32      fused bias  Beta*sum(W)*sum(Q) + b
    # x_ref:     VMEM (TB, TK)      flattened (batch, time*chan) tile (f32 or bf16)
    # w_ref:     VMEM (1, TK) f32   fused weight Gamma*Q_t*W_c tile
    # s_ref/h_ref: VMEM (TB, 1) f32 outputs (resident across the reduction axis)
    # acc_ref:   VMEM (TB, 1) f32   partial-sum accumulator
    k = pl.program_id(1)

    @pl.when(k == 0)
    def _():
        acc_ref[...] = jnp.zeros_like(acc_ref)

    # Upcast in-register (lets callers feed bf16 to halve HBM traffic; f32 acc).
    xb = x_ref[...].astype(jnp.float32)                       # (TB, TK)
    acc_ref[...] += jnp.sum(xb * w_ref[...], axis=-1, keepdims=True)

    @pl.when(k == pl.num_programs(1) - 1)
    def _():
        h = acc_ref[...] + b_eff_ref[0]
        h_ref[...] = h
        s_ref[...] = jax.nn.sigmoid(h)


def _round_up(a, m):
    return ((a + m - 1) // m) * m


def _choose_tiles(B, K, itemsize, block_b, block_k):
    # ~4 MiB per input tile (Pallas double-buffers it): conservative for the
    # v7x 64 MiB VMEM / 32 MiB scoped default, large enough to amortize the
    # ~0.35us per-grid-step overhead and sit near the HBM roofline on v5e/v6e.
    budget = 4 * 1024 * 1024
    if block_k is not None:
        tk = block_k
    elif 8 * K * itemsize <= budget:
        tk = K                                    # no reduction split needed
    else:
        tk = max(128, ((budget // (8 * itemsize)) // 128) * 128)
    if block_b is not None:
        tb = block_b
    else:
        tb = budget // max(1, tk * itemsize)
        tb = max(8, min(1024, (tb // 8) * 8))
        tb = min(tb, _round_up(B, 8))             # don't over-pad tiny batches
    return tb, tk


def gstf_forward(x, W_global, Q_global, b_global, Gamma_global, Beta_global,
                 *, block_b=None, block_k=None):
    """Forward pass of model_GSTF.

    x: (B, N_time, N_chan), float32 or bfloat16 (bf16 halves HBM traffic;
    accumulation stays float32).  Returns (s, h), each (B, 1) float32.
    """
    B, T, C = x.shape
    K = T * C
    itemsize = int(jnp.dtype(x.dtype).itemsize)

    # ---- fuse the tiny parameters outside the kernel (O(T*C) work) ----
    w = W_global.reshape(C).astype(jnp.float32)
    q = Q_global.reshape(T).astype(jnp.float32)
    gamma = Gamma_global.reshape(()).astype(jnp.float32)
    beta = Beta_global.reshape(()).astype(jnp.float32)
    bias = b_global.reshape(()).astype(jnp.float32)

    w_eff = (gamma * (q[:, None] * w[None, :])).reshape(1, K)        # (1, T*C)
    b_eff = (beta * jnp.sum(w) * jnp.sum(q) + bias).reshape(1)        # (1,)

    tb, tk = _choose_tiles(B, K, itemsize, block_b, block_k)
    n_b = pl.cdiv(B, tb)
    n_k = pl.cdiv(K, tk)
    B_pad = n_b * tb
    K_pad = n_k * tk

    x_flat = x.reshape(B, K)                      # free reshape: lane-dense T*C axis
    if B_pad != B or K_pad != K:
        x_flat = jnp.pad(x_flat, ((0, B_pad - B), (0, K_pad - K)))
    if K_pad != K:
        w_eff = jnp.pad(w_eff, ((0, 0), (0, K_pad - K)))

    s_pad, h_pad = pl.pallas_call(
        gstf_kernel,
        grid=(n_b, n_k),
        out_shape=(
            jax.ShapeDtypeStruct((B_pad, 1), jnp.float32),
            jax.ShapeDtypeStruct((B_pad, 1), jnp.float32),
        ),
        in_specs=[
            pl.BlockSpec(memory_space=pltpu.MemorySpace.SMEM),        # b_eff scalar
            pl.BlockSpec((tb, tk), lambda i, k: (i, k)),              # x tile
            pl.BlockSpec((1, tk), lambda i, k: (0, k)),               # w_eff tile
        ],
        out_specs=(
            pl.BlockSpec((tb, 1), lambda i, k: (i, 0)),
            pl.BlockSpec((tb, 1), lambda i, k: (i, 0)),
        ),
        scratch_shapes=[pltpu.VMEM((tb, 1), jnp.float32)],
        compiler_params=pltpu.CompilerParams(
            dimension_semantics=("parallel", "arbitrary"),
        ),
        cost_estimate=pl.CostEstimate(
            flops=int(2 * B_pad * K_pad),
            transcendentals=int(B_pad),
            bytes_accessed=int(B_pad * K_pad * itemsize + n_b * K_pad * 4
                               + 2 * B_pad * 4),
        ),
    )(b_eff, x_flat, w_eff)

    return s_pad[:B], h_pad[:B]


def gstf_reference(x, W, Q, b, gamma, beta):
    xg = gamma * x.astype(jnp.float32) + beta
    h1 = jnp.einsum("btc,co->bto", xg, W)         # (B, T, 1)
    h = jnp.squeeze(h1, -1) @ Q + b               # (B, 1)
    return jax.nn.sigmoid(h), h


if __name__ == "__main__":
    key = jax.random.PRNGKey(0)

    # (B, N_time, N_chan, gamma, beta, bias, block_b, block_k)
    cases = [
        (2, 8, 16, 1.0, 0.0, 0.0, None, None),      # module-like init, tiny demo
        (50, 12, 20, 1.5, 0.3, 0.1, None, None),    # batch padding, K not %128
        (20, 10, 40, 0.8, -0.2, 0.05, 8, 128),      # multi-tile grid + K accumulator
    ]
    for idx, (B, T, C, g, be, bi, bb, bk) in enumerate(cases):
        key, kx, kw, kq = jax.random.split(key, 4)
        W_global = 0.01 + 0.01 * jax.random.normal(kw, (C, 1), jnp.float32)
        Q_global = 0.01 + 0.01 * jax.random.normal(kq, (T, 1), jnp.float32)
        b_global = jnp.full((1,), bi, jnp.float32)
        Gamma_global = jnp.full((1,), g, jnp.float32)
        Beta_global = jnp.full((1,), be, jnp.float32)
        x = jax.random.normal(kx, (B, T, C), jnp.float32)

        s, h = gstf_forward(x, W_global, Q_global, b_global,
                            Gamma_global, Beta_global, block_b=bb, block_k=bk)
        jax.block_until_ready((s, h))

        s_ref, h_ref = gstf_reference(x, W_global, Q_global, b_global,
                                      Gamma_global, Beta_global)
        assert s.shape == (B, 1) and h.shape == (B, 1)
        assert jnp.allclose(h, h_ref, atol=1e-5, rtol=1e-4), f"case {idx}: h mismatch"
        assert jnp.allclose(s, s_ref, atol=1e-5, rtol=1e-4), f"case {idx}: s mismatch"

    print("KERNEL_OK")
</pallas_src>

<mosaic_0001>
module attributes {stable_mosaic.version = 11 : i64} {
  func.func @gstf_kernel(%arg0: i32, %arg1: i32, %arg2: memref<1xf32, #tpu.memory_space<smem>>, %arg3: memref<8x128xf32, #tpu.memory_space<vmem>>, %arg4: memref<1x128xf32, #tpu.memory_space<vmem>>, %arg5: memref<8x1xf32, #tpu.memory_space<vmem>>, %arg6: memref<8x1xf32, #tpu.memory_space<vmem>>, %arg7: memref<8x1xf32, #tpu.memory_space<vmem>>) attributes {dimension_semantics = [#tpu.dimension_semantics<parallel>, #tpu.dimension_semantics<arbitrary>], iteration_bounds = array<i64: 1, 1>, scalar_prefetch = 0 : i64, scratch_operands = 1 : i64, tpu.core_type = #tpu.core_type<tc>, window_params = [{transform_indices = @transform_0, window_bounds = array<i64: 1>}, {transform_indices = @transform_1, window_bounds = array<i64: 8, 128>}, {transform_indices = @transform_2, window_bounds = array<i64: 1, 128>}, {transform_indices = @transform_3, window_bounds = array<i64: 8, 1>}, {transform_indices = @transform_4, window_bounds = array<i64: 8, 1>}]} {
    %c0_i32 = arith.constant 0 : i32
    %0 = arith.cmpi eq, %arg1, %c0_i32 : i32
    %1 = arith.extui %0 : i1 to i32
    %c0_i32_0 = arith.constant 0 : i32
    %2 = arith.cmpi ne, %1, %c0_i32_0 : i32
    scf.if %2 {
      %cst_10 = arith.constant 0.000000e+00 : f32
      %15 = vector.broadcast %cst_10 : f32 to vector<8x1xf32>
      %c0_11 = arith.constant 0 : index
      %c0_12 = arith.constant 0 : index
      %16 = vector.load %arg7[%c0_11, %c0_12] : memref<8x1xf32, #tpu.memory_space<vmem>>, vector<8x1xf32>
      tpu.vector_store %arg7[%c0_11, %c0_12], %15 {strides = array<i32>} : memref<8x1xf32, #tpu.memory_space<vmem>>, vector<8x1xf32>,
    } else {
    }
    %c0 = arith.constant 0 : index
    %c0_1 = arith.constant 0 : index
    %3 = vector.load %arg3[%c0, %c0_1] : memref<8x128xf32, #tpu.memory_space<vmem>>, vector<8x128xf32>
    %c0_2 = arith.constant 0 : index
    %c0_3 = arith.constant 0 : index
    %4 = vector.load %arg7[%c0_2, %c0_3] : memref<8x1xf32, #tpu.memory_space<vmem>>, vector<8x1xf32>
    %c0_4 = arith.constant 0 : index
    %c0_5 = arith.constant 0 : index
    %5 = vector.load %arg4[%c0_4, %c0_5] : memref<1x128xf32, #tpu.memory_space<vmem>>, vector<1x128xf32>
    %6 = vector.broadcast %5 : vector<1x128xf32> to vector<8x128xf32>
    %7 = arith.mulf %3, %6 : vector<8x128xf32>
    %cst = arith.constant dense<0.000000e+00> : vector<8xf32>
    %8 = vector.multi_reduction <add>, %7, %cst [1] : vector<8x128xf32> to vector<8xf32>
    %9 = vector.shape_cast %8 : vector<8xf32> to vector<8x1xf32>
    %10 = arith.addf %4, %9 : vector<8x1xf32>
    %c0_6 = arith.constant 0 : index
    %c0_7 = arith.constant 0 : index
    %11 = vector.load %arg7[%c0_6, %c0_7] : memref<8x1xf32, #tpu.memory_space<vmem>>, vector<8x1xf32>
    tpu.vector_store %arg7[%c0_6, %c0_7], %10 {strides = array<i32>} : memref<8x1xf32, #tpu.memory_space<vmem>>, vector<8x1xf32>,
    %c0_i32_8 = arith.constant 0 : i32
    %12 = arith.cmpi eq, %arg1, %c0_i32_8 : i32
    %13 = arith.extui %12 : i1 to i32
    %c0_i32_9 = arith.constant 0 : i32
    %14 = arith.cmpi ne, %13, %c0_i32_9 : i32
    scf.if %14 {
      %c0_10 = arith.constant 0 : index
      %c0_11 = arith.constant 0 : index
      %15 = vector.load %arg7[%c0_10, %c0_11] : memref<8x1xf32, #tpu.memory_space<vmem>>, vector<8x1xf32>
      %c0_12 = arith.constant 0 : index
      %16 = memref.load %arg2[%c0_12] : memref<1xf32, #tpu.memory_space<smem>>
      %17 = vector.broadcast %16 : f32 to vector<8x1xf32>
      %18 = arith.addf %15, %17 : vector<8x1xf32>
      %c0_13 = arith.constant 0 : index
      %c0_14 = arith.constant 0 : index
      %19 = vector.load %arg6[%c0_13, %c0_14] : memref<8x1xf32, #tpu.memory_space<vmem>>, vector<8x1xf32>
      tpu.vector_store %arg6[%c0_13, %c0_14], %18 {strides = array<i32>} : memref<8x1xf32, #tpu.memory_space<vmem>>, vector<8x1xf32>,
      %20 = arith.negf %18 : vector<8x1xf32>
      %21 = math.exp %20 : vector<8x1xf32>
      %cst_15 = arith.constant 1.000000e+00 : f32
      %22 = vector.broadcast %cst_15 : f32 to vector<8x1xf32>
      %23 = arith.addf %22, %21 : vector<8x1xf32>
      %24 = arith.divf %22, %23 : vector<8x1xf32>
      %c0_16 = arith.constant 0 : index
      %c0_17 = arith.constant 0 : index
      %25 = vector.load %arg5[%c0_16, %c0_17] : memref<8x1xf32, #tpu.memory_space<vmem>>, vector<8x1xf32>
      tpu.vector_store %arg5[%c0_16, %c0_17], %24 {strides = array<i32>} : memref<8x1xf32, #tpu.memory_space<vmem>>, vector<8x1xf32>,
    } else {
    }
    return
  }
  func.func @transform_0(%arg0: i32, %arg1: i32) -> i32 {
    %c0_i32 = arith.constant 0 : i32
    %c0_i32_0 = arith.constant 0 : i32
    return %c0_i32 : i32
  }
  func.func @transform_1(%arg0: i32, %arg1: i32) -> (i32, i32) {
    %c0_i32 = arith.constant 0 : i32
    return %arg0, %arg1 : i32, i32
  }
  func.func @transform_2(%arg0: i32, %arg1: i32) -> (i32, i32) {
    %c0_i32 = arith.constant 0 : i32
    %c0_i32_0 = arith.constant 0 : i32
    return %c0_i32, %arg1 : i32, i32
  }
  func.func @transform_3(%arg0: i32, %arg1: i32) -> (i32, i32) {
    %c0_i32 = arith.constant 0 : i32
    %c0_i32_0 = arith.constant 0 : i32
    return %arg0, %c0_i32 : i32, i32
  }
  func.func @transform_4(%arg0: i32, %arg1: i32) -> (i32, i32) {
    %c0_i32 = arith.constant 0 : i32
    %c0_i32_0 = arith.constant 0 : i32
    return %arg0, %c0_i32 : i32, i32
  }
}

</mosaic_0001>

<llo_original>
// kernel: tpu_custom_call.1
$region0: #{tpu_custom_call.1}
  #allocation0 [shape = 'u32[]', space=smem, size = 0x4, offset = 0x4, fixed_abs, tag = 'smem constant byte address 0x4 - core index']
  #allocation1 [shape = 'u32[144,128]{1,0:T(1,128)}', space=vmem, size = 0x12000, scoped, tag = 'internal scratch']
  #allocation2 [shape = 'f32[8,1]{1,0:T(8,128)}', space=vmem, size = 0x1000, scoped, tag = 'scratch operand']
  #allocation3 [shape = 'f32[1]{0:T(128)S(6)}', space=smem, size = 0x200, scoped, tag = 'scoped memory for tpu_custom_call.1']
  %s0 = inlined_call_operand.<no memory space> [shape: f32[1], index: 0, kind: input, shape index: {}]
  %s1 = inlined_call_operand.hbm [shape: f32[8,128], index: 1, kind: input, shape index: {}]
  %s2 = inlined_call_operand.vmem [shape: f32[1,128], index: 2, kind: input, shape index: {}]
  %s3 = inlined_call_operand.vmem [shape: f32[8,1], index: 3, kind: output, shape index: {0}]
  %s4 = inlined_call_operand.vmem [shape: f32[8,1], index: 4, kind: output, shape index: {1}]
  %5 = xla_tuple %s3, %s4
  %s6 = sld [smem:[#allocation0]]
  $region42: #{tpu_custom_call.1} parent=0
    _
  %s8 = ssub.s32 1, %s6
  %s9 = scalar_select 0, %s8, %s6
  %10 = sst [smem:[#allocation3]] %s0
  $region1: #{tpu_custom_call.1} parent=0
    #allocation4 [shape = 'u8[4096]{0}', space=vmem, size = 0x1000, scoped, tag = 'input window, operand 1, single buffered']
    #allocation5 [shape = 's32[1]{0}', space=sflag, size = 0x4, scoped, tag = 'scoped memory for tpu_custom_call.1']
    %11 = vsyncpa [#allocation5], 0
    // Predicated region
    $region2: #{tpu_custom_call.1} parent=1 // pred_check
      _
    $region3: #{tpu_custom_call.1} parent=1 // pred_check_branch
      %13 = sbr.rel (0) target = $region5
    $region4: #{tpu_custom_call.1} parent=1 // pred_region
      _
    $region5: #{tpu_custom_call.1} parent=1 // pred_fallthru
      _
    // Predicated region
    $region6: #{tpu_custom_call.1} parent=1 // pred_check
      _
    $region7: #{tpu_custom_call.1} parent=1 // pred_check_branch
      %15 = sbr.rel (0) target = $region9
    $region8: #{tpu_custom_call.1} parent=1 // pred_region
      %s17 = ssub.s32 128, 128
      %18 = vsyncadd [#allocation5], %s17
      %s20 = sshll.u32 [#allocation4], 4
      %s21 = int_to_ptr.vmem [resolvable:$true] %s20
      %23 = dma.hbm_to_vmem [thread:$0]  %s1, 128, %s21, [#allocation5]
    $region9: #{tpu_custom_call.1} parent=1 // pred_fallthru
      _
    // Predicated region
    $region10: #{tpu_custom_call.1} parent=1 // pred_check
      _
    $region11: #{tpu_custom_call.1} parent=1 // pred_check_branch
      %25 = sbr.rel (0) target = $region13
    $region12: #{tpu_custom_call.1} parent=1 // pred_region
      _
    $region13: #{tpu_custom_call.1} parent=1 // pred_fallthru
      _
    // Predicated region
    $region14: #{tpu_custom_call.1} parent=1 // pred_check
      _
    $region15: #{tpu_custom_call.1} parent=1 // pred_check_branch
      %27 = sbr.rel (0) target = $region17
    $region16: #{tpu_custom_call.1} parent=1 // pred_region
      %28 = dma.done [#allocation5], 128
    $region17: #{tpu_custom_call.1} parent=1 // pred_fallthru
      _
    %p29 = scmp.eq.s32.totalorder 0, 0
    // Predicated region
    $region18: #{tpu_custom_call.1} parent=1 // pred_check
      %p30 = pneg %p29
    $region19: #{tpu_custom_call.1} parent=1 // pred_check_branch
      %32 = sbr.rel (%p30) target = $region21
    $region20: #{tpu_custom_call.1} parent=1 // pred_region
      %vm33 = vcmask 7168
      %34 = vst.msk [vmem:[#allocation2] sm:$0xff] %vm33, 0.0
    $region21: #{tpu_custom_call.1} parent=1 // pred_fallthru
      _
    %v35 = vld [vmem:[#allocation4] sm:$0xff]
    %v36 = vld [vmem:[#allocation2] sm:$0xff]
    %v37 = vld [vmem:[%s2] sm:$0x1]
    %v39 = vlaneseq
    %v40 = vshrl.u32 %v39, 7
    %v41 = vsub.s32 0, %v40
    %v42 = vrot.slane %v37, %v41
    %v44 = vmul.f32 %v35, %v42
    %45 = vadd.xlane.f32.xlu0 %v44
    %v46 = vpop.xlane.xlu0 %45
    %v47 = vadd.f32 %v36, %v46
    %vm48 = vcmask 7168
    %49 = vst.msk [vmem:[#allocation2] sm:$0xff] %vm48, %v47
    // Predicated region
    $region22: #{tpu_custom_call.1} parent=1 // pred_check
      %p50 = pneg %p29
    $region23: #{tpu_custom_call.1} parent=1 // pred_check_branch
      %52 = sbr.rel (%p50) target = $region25
    $region24: #{tpu_custom_call.1} parent=1 // pred_region
      %v53 = vld [vmem:[#allocation2] sm:$0xff]
      %s54 = sld [smem:[#allocation3]]
      %v55 = vstv %s54
      %v56 = vadd.f32 %v53, %v55
      %57 = vst.msk [vmem:[%s4] sm:$0xff] %vm48, %v56
      %v58 = vxor.u32 %v56, 2147483648
      %v59 = vmul.f32 %v58, 1.442695
      %v60 = vpow.pop %v59
      %v61 = vadd.f32 %v60, 1.0
      %v62 = vrcp.pop %v61
      %v63 = vmul.f32 1.0, %v62
      %64 = vst.msk [vmem:[%s3] sm:$0xff] %vm48, %v63
    $region25: #{tpu_custom_call.1} parent=1 // pred_fallthru
      _
    // Predicated region
    $region26: #{tpu_custom_call.1} parent=1 // pred_check
      _
    $region27: #{tpu_custom_call.1} parent=1 // pred_check_branch
      %66 = sbr.rel (0) target = $region29
    $region28: #{tpu_custom_call.1} parent=1 // pred_region
      _
    $region29: #{tpu_custom_call.1} parent=1 // pred_fallthru
      _
    // Predicated region
    $region30: #{tpu_custom_call.1} parent=1 // pred_check
      _
    $region31: #{tpu_custom_call.1} parent=1 // pred_check_branch
      %68 = sbr.rel (0) target = $region33
    $region32: #{tpu_custom_call.1} parent=1 // pred_region
      _
    $region33: #{tpu_custom_call.1} parent=1 // pred_fallthru
      _
    // Predicated region
    $region34: #{tpu_custom_call.1} parent=1 // pred_check
      _
    $region35: #{tpu_custom_call.1} parent=1 // pred_check_branch
      %70 = sbr.rel (0) target = $region37
    $region36: #{tpu_custom_call.1} parent=1 // pred_region
      _
    $region37: #{tpu_custom_call.1} parent=1 // pred_fallthru
      _
    // Predicated region
    $region38: #{tpu_custom_call.1} parent=1 // pred_check
      _
    $region39: #{tpu_custom_call.1} parent=1 // pred_check_branch
      %72 = sbr.rel (0) target = $region41
    $region40: #{tpu_custom_call.1} parent=1 // pred_region
      _
    $region41: #{tpu_custom_call.1} parent=1 // pred_fallthru
      _
    %73 = vsyncpa [#allocation5], 1

</llo_original>
